<compile_context>
chip_gen: v7x
topology: tpu7x:2x2x1
jax: 0.10.0
libtpu: 0.0.40
codegen_flags: <defaults>
</compile_context>

<pallas_src>
import functools

import jax
import jax.numpy as jnp
import numpy as np
from jax import lax
from jax.experimental import pallas as pl
from jax.experimental.pallas import tpu as pltpu


def _attention_kernel(*refs, num_heads: int, head_dim: int, eps: float,
                      compute_dtype, per_head: bool):
    """One grid step == one block of `b_blk` batch elements."""
    if per_head:
        x_ref, m_ref, g_ref, b_ref, wqkv_ref, bqkv_ref, o_ref = refs
        bd_ref = hdown_ref = hup_ref = None
    else:
        (x_ref, m_ref, g_ref, b_ref, wqkv_ref, bqkv_ref,
         bd_ref, hdown_ref, hup_ref, o_ref) = refs

    H, Dh = num_heads, head_dim
    D = H * Dh
    cd = compute_dtype
    f32 = jnp.float32
    approx = cd != jnp.float32   # EUP approx reciprocal only on the fast path

    x3 = x_ref[...]                          # (Bb, T, D) f32
    Bb, T, _ = x3.shape
    M = Bb * T
    x2 = x3.reshape(M, D)
    m2 = m_ref[...].reshape(M, 1)            # (M, 1) f32

    # ---- LayerNorm over D (biased variance, eps=1e-5), f32 on VPU/EUP ----
    mu = jnp.mean(x2, axis=-1, keepdims=True)
    xc = x2 - mu
    var = jnp.mean(xc * xc, axis=-1, keepdims=True)
    xn = xc * lax.rsqrt(var + eps) * g_ref[...] + b_ref[...]

    # ---- fused Q/K/V projection: one wide MXU matmul over all Bb*T rows ----
    qkv = jnp.dot(xn.astype(cd), wqkv_ref[...],
                  preferred_element_type=f32) + bqkv_ref[...]
    q2 = qkv[:, :D]
    k2 = qkv[:, D:2 * D] + (1.0 - m2) * (-1000000.0)   # key masking
    v2 = qkv[:, 2 * D:] * m2                            # value masking

    # ---- query softmax (dim = head_dim), kept in f32 ----
    if per_head:
        # Per-head max / sum / reciprocal-multiply on lane-aligned Dh slices.
        qsm_heads = []
        for h in range(H):
            lo = h * Dh
            qh = q2[:, lo:lo + Dh]
            qh = qh - jnp.max(qh, axis=-1, keepdims=True)
            qe = jnp.exp(qh)
            qs = jnp.sum(qe, axis=-1, keepdims=True)
            qsm_heads.append(
                (qe * pl.reciprocal(qs, approx=approx)).astype(cd))  # (M, Dh)
    else:
        # Global row max is an equivalent per-row shift; per-head denominators
        # via thin f32 indicator matmuls (T*D*H MACs instead of T*D*D) so the
        # normalizer is never bf16-rounded. Clamp guards an all-underflow head.
        qe = jnp.exp(q2 - jnp.max(q2, axis=-1, keepdims=True))
        qs_h = jnp.dot(qe, hdown_ref[...], preferred_element_type=f32)   # (M, H)
        qsum = jnp.dot(qs_h, hup_ref[...], preferred_element_type=f32)   # (M, D)
        qsum = jnp.maximum(qsum, 1e-30)
        qsm2 = (qe * pl.reciprocal(qsum, approx=approx)).astype(cd)      # (M, D)
        bd = bd_ref[...]                                                 # (D, D)

    # ---- per-batch-element attention (static loop over the batch block) ----
    for bi in range(Bb):
        r0 = bi * T
        k_b = k2[r0:r0 + T, :]                    # (T, D) f32
        v_b = v2[r0:r0 + T, :]                    # (T, D) f32
        # key softmax over T (per column == per head column), f32
        ke = jnp.exp(k_b - jnp.max(k_b, axis=0, keepdims=True))
        ksm = ke * pl.reciprocal(jnp.sum(ke, axis=0, keepdims=True),
                                 approx=approx)

        if per_head:
            yh = []
            for h in range(H):
                lo = h * Dh
                attn_h = lax.dot_general(                 # (Dh, Dh) = K_h^T V_h
                    ksm[:, lo:lo + Dh].astype(cd), v_b[:, lo:lo + Dh].astype(cd),
                    dimension_numbers=(((0,), (0,)), ((), ())),
                    preferred_element_type=f32)
                yh.append(jnp.dot(qsm_heads[h][r0:r0 + T, :],   # (T, Dh)
                                  attn_h.astype(cd),
                                  preferred_element_type=f32))
            y_b = jnp.concatenate(yh, axis=-1)             # (T, D)
        else:
            attn = lax.dot_general(                        # (D, D) = K^T V
                ksm.astype(cd), v_b.astype(cd),
                dimension_numbers=(((0,), (0,)), ((), ())),
                preferred_element_type=f32)
            attn = attn * bd                               # zero off-head blocks
            y_b = jnp.dot(qsm2[r0:r0 + T, :], attn.astype(cd),
                          preferred_element_type=f32)      # (T, D)

        o_ref[bi] = x3[bi] + y_b                           # residual, f32


def efficient_self_attention(x, src_mask, params, *, num_heads: int,
                             compute_dtype=jnp.bfloat16):
    """x: (B, T, D). src_mask: (B, T, 1) / (B, T) floats, or None.

    compute_dtype: bfloat16 = production fast path (MXU native, f32 accumulate);
    float32 = exact-numerics path. Returns (B, T, D) float32.
    """
    B, T, D = x.shape
    H = num_heads
    assert D % H == 0
    Dh = D // H
    f32 = jnp.float32
    per_head = (Dh % 128 == 0)

    if src_mask is None:
        src_mask = jnp.ones((B, T, 1), f32)
    src_mask = src_mask.reshape(B, T, 1).astype(f32)

    gamma = params["ln_gamma"].reshape(1, D).astype(f32)
    beta = params["ln_beta"].reshape(1, D).astype(f32)
    # Fused, pre-transposed QKV weight (D, 3D) and f32 bias (1, 3D).
    wqkv = jnp.concatenate([params["wq"].T, params["wk"].T, params["wv"].T],
                           axis=1).astype(compute_dtype)
    bqkv = jnp.concatenate([params["bq"], params["bk"], params["bv"]],
                           axis=0).reshape(1, 3 * D).astype(f32)

    # ---- VMEM budget from the actual chip, with headroom (v7x: 64 MiB/TC) ----
    try:
        vmem_cap = int(pltpu.get_tpu_info().vmem_capacity_bytes)
    except Exception:
        vmem_cap = 64 * 1024 * 1024
    budget = min(vmem_cap, max(32 * 1024 * 1024, int(vmem_cap * 0.75)))

    # ---- batch blocking: largest divisor of B whose working set fits ----
    w_item = jnp.dtype(compute_dtype).itemsize
    fixed = D * 3 * D * w_item + 8 * D * 4 + D * D * 4 + 2 * D * H * 4
    per_b = (4 * T * D * 4            # double-buffered x in + out blocks
             + 2 * T * 128 * 4        # double-buffered mask block (lane-padded)
             + 14 * T * D * 4         # live f32 (T, D / 3D)-class intermediates
             + 2 * D * D * 4)         # per-batch attention matrix + scratch
    max_bb = max(1, int((budget - fixed) // per_b))
    # Keep grid length >= 2 when B >= 2 so both v7x TensorCores get work.
    cap = min(max_bb, 1 if B < 2 else max(1, B // 2))
    b_blk = 1
    for d in range(1, B + 1):
        if B % d == 0 and d <= cap:
            b_blk = d
    grid = (B // b_blk,)

    in_arrays = [x.astype(f32), src_mask, gamma, beta, wqkv, bqkv]
    in_specs = [
        pl.BlockSpec((b_blk, T, D), lambda b: (b, 0, 0)),   # x
        pl.BlockSpec((b_blk, T, 1), lambda b: (b, 0, 0)),   # src_mask
        pl.BlockSpec((1, D), lambda b: (0, 0)),             # LN gamma
        pl.BlockSpec((1, D), lambda b: (0, 0)),             # LN beta
        pl.BlockSpec((D, 3 * D), lambda b: (0, 0)),         # fused Wqkv^T
        pl.BlockSpec((1, 3 * D), lambda b: (0, 0)),         # fused bias
    ]
    if not per_head:
        # Hoisted constants for the dense block-diagonal path, held resident
        # in VMEM via constant index maps (no per-step iota/divide on the VALU).
        rows = np.arange(D) // Dh
        bd = jnp.asarray((rows[:, None] == rows[None, :]).astype(np.float32))
        hdown = jnp.asarray(
            (rows[:, None] == np.arange(H)[None, :]).astype(np.float32))   # (D, H)
        hup = jnp.asarray(
            (np.arange(H)[:, None] == rows[None, :]).astype(np.float32))   # (H, D)
        in_arrays += [bd, hdown, hup]
        in_specs += [
            pl.BlockSpec((D, D), lambda b: (0, 0)),
            pl.BlockSpec((D, H), lambda b: (0, 0)),
            pl.BlockSpec((H, D), lambda b: (0, 0)),
        ]

    kernel = functools.partial(
        _attention_kernel, num_heads=H, head_dim=Dh, eps=1e-5,
        compute_dtype=compute_dtype, per_head=per_head)

    return pl.pallas_call(
        kernel,
        out_shape=jax.ShapeDtypeStruct((B, T, D), f32),
        grid_spec=pltpu.PrefetchScalarGridSpec(
            num_scalar_prefetch=0,
            grid=grid,
            in_specs=in_specs,
            out_specs=pl.BlockSpec((b_blk, T, D), lambda b: (b, 0, 0)),
        ),
        compiler_params=pltpu.CompilerParams(
            dimension_semantics=("parallel",),
            vmem_limit_bytes=int(budget)),
    )(*in_arrays)


def _reference(x, src_mask, params, num_heads):
    """Pure-JAX transcription of the PyTorch forward (src_mask given)."""
    B, T, D = x.shape
    H = num_heads
    Dh = D // H
    prec = "highest"
    mu = jnp.mean(x, axis=-1, keepdims=True)
    var = jnp.mean((x - mu) ** 2, axis=-1, keepdims=True)
    xn = (x - mu) / jnp.sqrt(var + 1e-5) * params["ln_gamma"] + params["ln_beta"]
    q = jnp.dot(xn, params["wq"].T, precision=prec) + params["bq"]
    k = (jnp.dot(xn, params["wk"].T, precision=prec) + params["bk"]
         + (1.0 - src_mask) * (-1000000.0))
    v = (jnp.dot(xn, params["wv"].T, precision=prec) + params["bv"]) * src_mask
    q = jax.nn.softmax(q.reshape(B, T, H, Dh), axis=-1)
    k = jax.nn.softmax(k.reshape(B, T, H, Dh), axis=1)
    v = v.reshape(B, T, H, Dh)
    attn = jnp.einsum("bnhd,bnhl->bhdl", k, v, precision=prec)
    y = jnp.einsum("bnhd,bhdl->bnhl", q, attn, precision=prec).reshape(B, T, D)
    return x + y


def _make_inputs(key, B, T, D):
    ks = jax.random.split(key, 7)
    scale = 1.0 / np.sqrt(D)
    params = {
        "ln_gamma": jnp.ones((D,), jnp.float32),
        "ln_beta": jnp.zeros((D,), jnp.float32),
        "wq": jax.random.uniform(ks[0], (D, D), jnp.float32, -scale, scale),
        "bq": jax.random.uniform(ks[1], (D,), jnp.float32, -scale, scale),
        "wk": jax.random.uniform(ks[2], (D, D), jnp.float32, -scale, scale),
        "bk": jax.random.uniform(ks[3], (D,), jnp.float32, -scale, scale),
        "wv": jax.random.uniform(ks[4], (D, D), jnp.float32, -scale, scale),
        "bv": jax.random.uniform(ks[5], (D,), jnp.float32, -scale, scale),
    }
    x = jax.random.normal(ks[6], (B, T, D), jnp.float32)
    mask = jnp.ones((B, T, 1), jnp.float32)
    mask = mask.at[1, T - 3:, 0].set(0.0)   # second batch: last 3 steps masked
    return x, mask, params


if __name__ == "__main__":
    key = jax.random.PRNGKey(0)
    k1, k2 = jax.random.split(key)

    # --- config 1: dense block-diagonal path (head_dim < 128) ---
    B, T, D, H = 2, 8, 32, 4
    x, mask, params = _make_inputs(k1, B, T, D)
    ref = _reference(x, mask, params, H)
    out_f32 = jax.block_until_ready(
        efficient_self_attention(x, mask, params, num_heads=H,
                                 compute_dtype=jnp.float32))
    np.testing.assert_allclose(np.asarray(out_f32), np.asarray(ref),
                               rtol=5e-3, atol=5e-3)
    out_bf16 = jax.block_until_ready(
        efficient_self_attention(x, mask, params, num_heads=H,
                                 compute_dtype=jnp.bfloat16))
    np.testing.assert_allclose(np.asarray(out_bf16), np.asarray(ref),
                               rtol=5e-2, atol=5e-2)

    # --- config 2: per-head contraction path (head_dim == 128) ---
    B, T, D, H = 2, 16, 256, 2
    x, mask, params = _make_inputs(k2, B, T, D)
    ref = _reference(x, mask, params, H)
    out_f32 = jax.block_until_ready(
        efficient_self_attention(x, mask, params, num_heads=H,
                                 compute_dtype=jnp.float32))
    np.testing.assert_allclose(np.asarray(out_f32), np.asarray(ref),
                               rtol=5e-3, atol=5e-3)
    out_bf16 = jax.block_until_ready(
        efficient_self_attention(x, mask, params, num_heads=H,
                                 compute_dtype=jnp.bfloat16))
    np.testing.assert_allclose(np.asarray(out_bf16), np.asarray(ref),
                               rtol=5e-2, atol=5e-2)

    print("KERNEL_OK")
</pallas_src>

<mosaic_0001>
module attributes {stable_mosaic.version = 11 : i64} {
  func.func @_attention_kernel(%arg0: i32, %arg1: memref<1x8x32xf32, #tpu.memory_space<vmem>>, %arg2: memref<1x8x1xf32, #tpu.memory_space<vmem>>, %arg3: memref<1x32xf32, #tpu.memory_space<vmem>>, %arg4: memref<1x32xf32, #tpu.memory_space<vmem>>, %arg5: memref<32x96xf32, #tpu.memory_space<vmem>>, %arg6: memref<1x96xf32, #tpu.memory_space<vmem>>, %arg7: memref<32x32xf32, #tpu.memory_space<vmem>>, %arg8: memref<32x4xf32, #tpu.memory_space<vmem>>, %arg9: memref<4x32xf32, #tpu.memory_space<vmem>>, %arg10: memref<1x8x32xf32, #tpu.memory_space<vmem>>) attributes {dimension_semantics = [#tpu.dimension_semantics<parallel>], iteration_bounds = array<i64: 2>, scalar_prefetch = 0 : i64, scratch_operands = 0 : i64, tpu.core_type = #tpu.core_type<tc>, window_params = [{transform_indices = @transform_0, window_bounds = array<i64: 1, 8, 32>}, {transform_indices = @transform_1, window_bounds = array<i64: 1, 8, 1>}, {pipeline_mode = #tpu.pipeline_mode<synchronous>, transform_indices = @transform_2, window_bounds = array<i64: 1, 32>}, {pipeline_mode = #tpu.pipeline_mode<synchronous>, transform_indices = @transform_3, window_bounds = array<i64: 1, 32>}, {pipeline_mode = #tpu.pipeline_mode<synchronous>, transform_indices = @transform_4, window_bounds = array<i64: 32, 96>}, {pipeline_mode = #tpu.pipeline_mode<synchronous>, transform_indices = @transform_5, window_bounds = array<i64: 1, 96>}, {pipeline_mode = #tpu.pipeline_mode<synchronous>, transform_indices = @transform_6, window_bounds = array<i64: 32, 32>}, {pipeline_mode = #tpu.pipeline_mode<synchronous>, transform_indices = @transform_7, window_bounds = array<i64: 32, 4>}, {pipeline_mode = #tpu.pipeline_mode<synchronous>, transform_indices = @transform_8, window_bounds = array<i64: 4, 32>}, {transform_indices = @transform_9, window_bounds = array<i64: 1, 8, 32>}]} {
    %c0 = arith.constant 0 : index
    %c0_0 = arith.constant 0 : index
    %c0_1 = arith.constant 0 : index
    %0 = vector.load %arg1[%c0, %c0_0, %c0_1] : memref<1x8x32xf32, #tpu.memory_space<vmem>>, vector<1x8x32xf32>
    %1 = vector.shape_cast %0 : vector<1x8x32xf32> to vector<8x32xf32>
    %c0_2 = arith.constant 0 : index
    %c0_3 = arith.constant 0 : index
    %c0_4 = arith.constant 0 : index
    %2 = vector.load %arg2[%c0_2, %c0_3, %c0_4] : memref<1x8x1xf32, #tpu.memory_space<vmem>>, vector<1x8x1xf32>
    %3 = vector.shape_cast %2 : vector<1x8x1xf32> to vector<8x1xf32>
    %cst = arith.constant dense<0.000000e+00> : vector<8xf32>
    %4 = vector.multi_reduction <add>, %1, %cst [1] : vector<8x32xf32> to vector<8xf32>
    %5 = vector.shape_cast %4 : vector<8xf32> to vector<8x1xf32>
    %cst_5 = arith.constant 3.200000e+01 : f32
    %6 = vector.broadcast %cst_5 : f32 to vector<8x1xf32>
    %7 = arith.divf %5, %6 : vector<8x1xf32>
    %8 = vector.broadcast %7 : vector<8x1xf32> to vector<8x32xf32>
    %9 = arith.subf %1, %8 : vector<8x32xf32>
    %10 = arith.mulf %9, %9 : vector<8x32xf32>
    %cst_6 = arith.constant dense<0.000000e+00> : vector<8xf32>
    %11 = vector.multi_reduction <add>, %10, %cst_6 [1] : vector<8x32xf32> to vector<8xf32>
    %12 = vector.shape_cast %11 : vector<8xf32> to vector<8x1xf32>
    %cst_7 = arith.constant 3.200000e+01 : f32
    %13 = vector.broadcast %cst_7 : f32 to vector<8x1xf32>
    %14 = arith.divf %12, %13 : vector<8x1xf32>
    %cst_8 = arith.constant 9.99999974E-6 : f32
    %15 = vector.broadcast %cst_8 : f32 to vector<8x1xf32>
    %16 = arith.addf %14, %15 : vector<8x1xf32>
    %17 = math.rsqrt %16 : vector<8x1xf32>
    %18 = vector.broadcast %17 : vector<8x1xf32> to vector<8x32xf32>
    %19 = arith.mulf %9, %18 : vector<8x32xf32>
    %c0_9 = arith.constant 0 : index
    %c0_10 = arith.constant 0 : index
    %20 = vector.load %arg3[%c0_9, %c0_10] : memref<1x32xf32, #tpu.memory_space<vmem>>, vector<1x32xf32>
    %21 = vector.broadcast %20 : vector<1x32xf32> to vector<8x32xf32>
    %22 = arith.mulf %19, %21 : vector<8x32xf32>
    %c0_11 = arith.constant 0 : index
    %c0_12 = arith.constant 0 : index
    %23 = vector.load %arg4[%c0_11, %c0_12] : memref<1x32xf32, #tpu.memory_space<vmem>>, vector<1x32xf32>
    %24 = vector.broadcast %23 : vector<1x32xf32> to vector<8x32xf32>
    %25 = arith.addf %22, %24 : vector<8x32xf32>
    %c0_13 = arith.constant 0 : index
    %c0_14 = arith.constant 0 : index
    %26 = vector.load %arg5[%c0_13, %c0_14] : memref<32x96xf32, #tpu.memory_space<vmem>>, vector<32x96xf32>
    %cst_15 = arith.constant dense<0.000000e+00> : vector<8x96xf32>
    %27 = tpu.matmul %25, %26, %cst_15 {dimension_numbers = #tpu.dot_dimension_numbers<[1], [0], [0], [1], [0, 0, 1, 1], [], []>} : vector<8x32xf32>, vector<32x96xf32>, vector<8x96xf32> -> vector<8x96xf32>
    %c0_16 = arith.constant 0 : index
    %c0_17 = arith.constant 0 : index
    %28 = vector.load %arg6[%c0_16, %c0_17] : memref<1x96xf32, #tpu.memory_space<vmem>>, vector<1x96xf32>
    %29 = vector.broadcast %28 : vector<1x96xf32> to vector<8x96xf32>
    %30 = arith.addf %27, %29 : vector<8x96xf32>
    %31 = vector.extract_strided_slice %30 {offsets = [0, 0], sizes = [8, 32], strides = [1, 1]} : vector<8x96xf32> to vector<8x32xf32>
    %32 = vector.extract_strided_slice %30 {offsets = [0, 32], sizes = [8, 32], strides = [1, 1]} : vector<8x96xf32> to vector<8x32xf32>
    %cst_18 = arith.constant 1.000000e+00 : f32
    %33 = vector.broadcast %cst_18 : f32 to vector<8x1xf32>
    %34 = arith.subf %33, %3 : vector<8x1xf32>
    %cst_19 = arith.constant -1.000000e+06 : f32
    %35 = vector.broadcast %cst_19 : f32 to vector<8x1xf32>
    %36 = arith.mulf %34, %35 : vector<8x1xf32>
    %37 = vector.broadcast %36 : vector<8x1xf32> to vector<8x32xf32>
    %38 = arith.addf %32, %37 : vector<8x32xf32>
    %39 = vector.extract_strided_slice %30 {offsets = [0, 64], sizes = [8, 32], strides = [1, 1]} : vector<8x96xf32> to vector<8x32xf32>
    %40 = vector.broadcast %3 : vector<8x1xf32> to vector<8x32xf32>
    %41 = arith.mulf %39, %40 : vector<8x32xf32>
    %cst_20 = arith.constant dense<0xFF800000> : vector<8xf32>
    %42 = vector.multi_reduction <maximumf>, %31, %cst_20 [1] : vector<8x32xf32> to vector<8xf32>
    %43 = vector.shape_cast %42 : vector<8xf32> to vector<8x1xf32>
    %44 = vector.broadcast %43 : vector<8x1xf32> to vector<8x32xf32>
    %45 = arith.subf %31, %44 : vector<8x32xf32>
    %46 = math.exp %45 : vector<8x32xf32>
    %c0_21 = arith.constant 0 : index
    %c0_22 = arith.constant 0 : index
    %47 = vector.load %arg8[%c0_21, %c0_22] : memref<32x4xf32, #tpu.memory_space<vmem>>, vector<32x4xf32>
    %cst_23 = arith.constant dense<0.000000e+00> : vector<8x4xf32>
    %48 = tpu.matmul %46, %47, %cst_23 {dimension_numbers = #tpu.dot_dimension_numbers<[1], [0], [0], [1], [0, 0, 1, 1], [], []>} : vector<8x32xf32>, vector<32x4xf32>, vector<8x4xf32> -> vector<8x4xf32>
    %c0_24 = arith.constant 0 : index
    %c0_25 = arith.constant 0 : index
    %49 = vector.load %arg9[%c0_24, %c0_25] : memref<4x32xf32, #tpu.memory_space<vmem>>, vector<4x32xf32>
    %cst_26 = arith.constant dense<0.000000e+00> : vector<8x32xf32>
    %50 = tpu.matmul %48, %49, %cst_26 {dimension_numbers = #tpu.dot_dimension_numbers<[1], [0], [0], [1], [0, 0, 1, 1], [], []>} : vector<8x4xf32>, vector<4x32xf32>, vector<8x32xf32> -> vector<8x32xf32>
    %cst_27 = arith.constant 1.000000e-30 : f32
    %51 = vector.broadcast %cst_27 : f32 to vector<8x32xf32>
    %52 = arith.maximumf %50, %51 : vector<8x32xf32>
    %53 = tpu.reciprocal %52 : vector<8x32xf32> -> vector<8x32xf32>
    %54 = arith.mulf %46, %53 : vector<8x32xf32>
    %c0_28 = arith.constant 0 : index
    %c0_29 = arith.constant 0 : index
    %55 = vector.load %arg7[%c0_28, %c0_29] : memref<32x32xf32, #tpu.memory_space<vmem>>, vector<32x32xf32>
    %cst_30 = arith.constant dense<0xFF800000> : vector<32xf32>
    %56 = vector.multi_reduction <maximumf>, %38, %cst_30 [0] : vector<8x32xf32> to vector<32xf32>
    %57 = vector.shape_cast %56 : vector<32xf32> to vector<1x32xf32>
    %58 = vector.broadcast %57 : vector<1x32xf32> to vector<8x32xf32>
    %59 = arith.subf %38, %58 : vector<8x32xf32>
    %60 = math.exp %59 : vector<8x32xf32>
    %cst_31 = arith.constant dense<0.000000e+00> : vector<32xf32>
    %61 = vector.multi_reduction <add>, %60, %cst_31 [0] : vector<8x32xf32> to vector<32xf32>
    %62 = vector.shape_cast %61 : vector<32xf32> to vector<1x32xf32>
    %63 = tpu.reciprocal %62 : vector<1x32xf32> -> vector<1x32xf32>
    %64 = vector.broadcast %63 : vector<1x32xf32> to vector<8x32xf32>
    %65 = arith.mulf %60, %64 : vector<8x32xf32>
    %cst_32 = arith.constant dense<0.000000e+00> : vector<32x32xf32>
    %66 = tpu.matmul %65, %41, %cst_32 {dimension_numbers = #tpu.dot_dimension_numbers<[0], [0], [1], [1], [0, 1, 1, 1], [], []>} : vector<8x32xf32>, vector<8x32xf32>, vector<32x32xf32> -> vector<32x32xf32>
    %67 = arith.mulf %66, %55 : vector<32x32xf32>
    %cst_33 = arith.constant dense<0.000000e+00> : vector<8x32xf32>
    %68 = tpu.matmul %54, %67, %cst_33 {dimension_numbers = #tpu.dot_dimension_numbers<[1], [0], [0], [1], [0, 0, 1, 1], [], []>} : vector<8x32xf32>, vector<32x32xf32>, vector<8x32xf32> -> vector<8x32xf32>
    %69 = vector.shape_cast %0 : vector<1x8x32xf32> to vector<8x32xf32>
    %70 = arith.addf %69, %68 : vector<8x32xf32>
    %c0_34 = arith.constant 0 : index
    %c0_35 = arith.constant 0 : index
    %c0_36 = arith.constant 0 : index
    %71 = vector.load %arg10[%c0_34, %c0_35, %c0_36] : memref<1x8x32xf32, #tpu.memory_space<vmem>>, vector<1x8x32xf32>
    %72 = vector.shape_cast %71 : vector<1x8x32xf32> to vector<8x32xf32>
    %73 = vector.shape_cast %70 : vector<8x32xf32> to vector<1x8x32xf32>
    tpu.vector_store %arg10[%c0_34, %c0_35, %c0_36], %73 {strides = array<i32>} : memref<1x8x32xf32, #tpu.memory_space<vmem>>, vector<1x8x32xf32>,
    return
  }
  func.func @transform_0(%arg0: i32) -> (i32, i32, i32) {
    %c0_i32 = arith.constant 0 : i32
    %c0_i32_0 = arith.constant 0 : i32
    %c0_i32_1 = arith.constant 0 : i32
    return %arg0, %c0_i32, %c0_i32_0 : i32, i32, i32
  }
  func.func @transform_1(%arg0: i32) -> (i32, i32, i32) {
    %c0_i32 = arith.constant 0 : i32
    %c0_i32_0 = arith.constant 0 : i32
    %c0_i32_1 = arith.constant 0 : i32
    return %arg0, %c0_i32, %c0_i32_0 : i32, i32, i32
  }
  func.func @transform_2(%arg0: i32) -> (i32, i32) {
    %c0_i32 = arith.constant 0 : i32
    %c0_i32_0 = arith.constant 0 : i32
    %c0_i32_1 = arith.constant 0 : i32
    return %c0_i32, %c0_i32_0 : i32, i32
  }
  func.func @transform_3(%arg0: i32) -> (i32, i32) {
    %c0_i32 = arith.constant 0 : i32
    %c0_i32_0 = arith.constant 0 : i32
    %c0_i32_1 = arith.constant 0 : i32
    return %c0_i32, %c0_i32_0 : i32, i32
  }
  func.func @transform_4(%arg0: i32) -> (i32, i32) {
    %c0_i32 = arith.constant 0 : i32
    %c0_i32_0 = arith.constant 0 : i32
    %c0_i32_1 = arith.constant 0 : i32
    return %c0_i32, %c0_i32_0 : i32, i32
  }
  func.func @transform_5(%arg0: i32) -> (i32, i32) {
    %c0_i32 = arith.constant 0 : i32
    %c0_i32_0 = arith.constant 0 : i32
    %c0_i32_1 = arith.constant 0 : i32
    return %c0_i32, %c0_i32_0 : i32, i32
  }
  func.func @transform_6(%arg0: i32) -> (i32, i32) {
    %c0_i32 = arith.constant 0 : i32
    %c0_i32_0 = arith.constant 0 : i32
    %c0_i32_1 = arith.constant 0 : i32
    return %c0_i32, %c0_i32_0 : i32, i32
  }
  func.func @transform_7(%arg0: i32) -> (i32, i32) {
    %c0_i32 = arith.constant 0 : i32
    %c0_i32_0 = arith.constant 0 : i32
    %c0_i32_1 = arith.constant 0 : i32
    return %c0_i32, %c0_i32_0 : i32, i32
  }
  func.func @transform_8(%arg0: i32) -> (i32, i32) {
    %c0_i32 = arith.constant 0 : i32
    %c0_i32_0 = arith.constant 0 : i32
    %c0_i32_1 = arith.constant 0 : i32
    return %c0_i32, %c0_i32_0 : i32, i32
  }
  func.func @transform_9(%arg0: i32) -> (i32, i32, i32) {
    %c0_i32 = arith.constant 0 : i32
    %c0_i32_0 = arith.constant 0 : i32
    %c0_i32_1 = arith.constant 0 : i32
    return %arg0, %c0_i32, %c0_i32_0 : i32, i32, i32
  }
}

</mosaic_0001>

<llo_original>
// kernel: tpu_custom_call.1
$region0: #{tpu_custom_call.1}
  #allocation0 [shape = 'u32[]', space=smem, size = 0x4, offset = 0x4, fixed_abs, tag = 'smem constant byte address 0x4 - core index']
  #allocation1 [shape = 'u32[144,128]{1,0:T(1,128)}', space=vmem, size = 0x12000, scoped, tag = 'internal scratch']
  %s0 = inlined_call_operand.hbm [shape: f32[2,8,32], index: 0, kind: input, shape index: {}]
  %s1 = inlined_call_operand.vmem [shape: f32[2,8,1], index: 1, kind: input, shape index: {}]
  %s2 = inlined_call_operand.hbm [shape: f32[1,32], index: 2, kind: input, shape index: {}]
  %s3 = inlined_call_operand.hbm [shape: f32[1,32], index: 3, kind: input, shape index: {}]
  %s4 = inlined_call_operand.vmem [shape: f32[32,96], index: 4, kind: input, shape index: {}]
  %s5 = inlined_call_operand.hbm [shape: f32[1,96], index: 5, kind: input, shape index: {}]
  %s6 = inlined_call_operand.vmem [shape: f32[32,32], index: 6, kind: input, shape index: {}]
  %s7 = inlined_call_operand.vmem [shape: f32[32,4], index: 7, kind: input, shape index: {}]
  %s8 = inlined_call_operand.vmem [shape: f32[4,32], index: 8, kind: input, shape index: {}]
  %s9 = inlined_call_operand.hbm [shape: f32[2,8,32], index: 9, kind: output, shape index: {}]
  %s10 = sld [smem:[#allocation0]]
  $region85: #{tpu_custom_call.1} parent=0
    _
  %s12 = ssub.s32 1, %s10
  %s13 = scalar_select 0, %s12, %s10
  $region1: #{tpu_custom_call.1} parent=0
    #allocation2 [shape = 'u8[8192]{0}', space=vmem, size = 0x2000, scoped, tag = 'input window, operand 0']
    #allocation3 [shape = 's32[2]{0}', space=sflag, size = 0x8, scoped, tag = 'scoped memory for tpu_custom_call.1']
    #allocation4 [shape = 's32[2]{0}', space=sflag, size = 0x8, scoped, tag = 'scoped memory for tpu_custom_call.1']
    #allocation5 [shape = 'u8[512]{0}', space=vmem, size = 0x400, scoped, tag = 'input window, operand 2, single buffered']
    #allocation6 [shape = 's32[1]{0}', space=sflag, size = 0x4, scoped, tag = 'scoped memory for tpu_custom_call.1']
    #allocation7 [shape = 'u8[512]{0}', space=vmem, size = 0x400, scoped, tag = 'input window, operand 3, single buffered']
    #allocation8 [shape = 'u8[512]{0}', space=vmem, size = 0x400, scoped, tag = 'input window, operand 5, single buffered']
    #allocation9 [shape = 's32[1]{0}', space=sflag, size = 0x4, scoped, tag = 'scoped memory for tpu_custom_call.1']
    #allocation10 [shape = 'u8[8192]{0}', space=vmem, size = 0x2000, scoped, tag = 'output window, operand 0']
    %14 = vsyncpa [#allocation3], 0
    %s15 = scalar_lea.sflag [#allocation3], 1
    %16 = vsyncpa %s15, 0
    %17 = vsyncpa [#allocation6], 0
    %18 = vsyncpa [#allocation9], 0
    %19 = vsyncpa [#allocation4], 0
    %s20 = scalar_lea.sflag [#allocation4], 1
    %21 = vsyncpa %s20, 0
    loop: start=0, step=1, limit=4
    $region2: #{tpu_custom_call.1} parent=1 // loop_pre_header
      _
    $region3: #{tpu_custom_call.1} parent=1 // loop_header
      %s23 = sphi 0, %s27
      %p24 = scmp.ge.s32.totalorder %s23, 4
      %s33 = sphi 0, %s35
      %s36 = sphi 0, %s33
      %s37 = sphi 0, %s36
      %s53 = sphi 0, %s37
      %s59 = sphi 0, %s61
      %s62 = sphi 0, %s59
      %s63 = sphi 0, %s62
      %s79 = sphi 0, %s63
      %s83 = sphi 0, %s83
      %s85 = sphi 0, %s83
      %s86 = sphi 0, %s85
      %s100 = sphi 0, %s86
      %s104 = sphi 0, %s104
      %s106 = sphi 0, %s104
      %s107 = sphi 0, %s106
      %s121 = sphi 0, %s107
      %s125 = sphi 0, %s125
      %s127 = sphi 0, %s125
      %s128 = sphi 0, %s127
      %s142 = sphi 0, %s128
      %s146 = sphi 0, %s146
      %s148 = sphi 0, %s146
      %s149 = sphi 0, %s148
      %s163 = sphi 0, %s149
      %s167 = sphi 0, %s167
      %s169 = sphi 0, %s167
      %s170 = sphi 0, %s169
      %s184 = sphi 0, %s170
      %s188 = sphi 0, %s188
      %s190 = sphi 0, %s188
      %s191 = sphi 0, %s190
      %s205 = sphi 0, %s191
      %s209 = sphi 0, %s209
      %s211 = sphi 0, %s209
      %s212 = sphi 0, %s211
      %s226 = sphi 0, %s212
      %s232 = sphi 0, %s234
      %s235 = sphi 0, %s232
      %s236 = sphi 0, %s235
      %s252 = sphi 0, %s236
    $region4: #{tpu_custom_call.1} parent=1 // loop_header_branch
      %26 = sbr.rel (%p24) target = $region8
    $region5: #{tpu_custom_call.1} parent=1 // loop_body
      %s28 = ssub.s32 %s23, 1
      %s29 = ssub.s32 %s23, 2
      %s30 = sadd.s32 %s23, 1
      %s31 = ssub.s32 %s23, %s30
      %p32 = scmp.eq.s32.totalorder %s31, 0
      %s34 = sadd.s32 %s33, 1
      %s35 = scalar_select %p32, %s33, %s34
      %p38 = pneg %p32
      %p39 = scmp.eq.s32.totalorder %s23, 1
      %p40 = por %p38, %p39
      %p41 = scmp.ne.s32.totalorder %s33, %s36
      %p42 = scmp.eq.s32.totalorder %s23, 0
      %p43 = por %p41, %p42
      %p44 = scmp.ne.s32.totalorder %s33, %s36
      %p45 = scmp.eq.s32.totalorder %s28, 1
      %p46 = por %p44, %p45
      %p47 = scmp.ne.s32.totalorder %s36, %s37
      %p48 = scmp.eq.s32.totalorder %s28, 0
      %p49 = por %p47, %p48
      %p50 = scmp.ne.s32.totalorder %s36, %s37
      %p51 = scmp.eq.s32.totalorder %s29, 1
      %p52 = por %p50, %p51
      %p54 = scmp.ne.s32.totalorder %s37, %s53
      %p55 = scmp.eq.s32.totalorder %s29, 0
      %p56 = por %p54, %p55
      %s57 = ssub.s32 %s23, %s30
      %p58 = scmp.eq.s32.totalorder %s57, 0
      %s60 = sadd.s32 %s59, 1
      %s61 = scalar_select %p58, %s59, %s60
      %p64 = pneg %p58
      %p65 = scmp.eq.s32.totalorder %s23, 1
      %p66 = por %p64, %p65
      %p67 = scmp.ne.s32.totalorder %s59, %s62
      %p68 = scmp.eq.s32.totalorder %s23, 0
      %p69 = por %p67, %p68
      %p70 = scmp.ne.s32.totalorder %s59, %s62
      %p71 = scmp.eq.s32.totalorder %s28, 1
      %p72 = por %p70, %p71
      %p73 = scmp.ne.s32.totalorder %s62, %s63
      %p74 = scmp.eq.s32.totalorder %s28, 0
      %p75 = por %p73, %p74
      %p76 = scmp.ne.s32.totalorder %s62, %s63
      %p77 = scmp.eq.s32.totalorder %s29, 1
      %p78 = por %p76, %p77
      %p80 = scmp.ne.s32.totalorder %s63, %s79
      %p81 = scmp.eq.s32.totalorder %s29, 0
      %p82 = por %p80, %p81
      %s84 = sadd.s32 %s83, 1
      %p87 = scmp.eq.s32.totalorder %s23, 1
      %p88 = scmp.ne.s32.totalorder %s83, %s85
      %p89 = scmp.eq.s32.totalorder %s23, 0
      %p90 = por %p88, %p89
      %p91 = scmp.ne.s32.totalorder %s83, %s85
      %p92 = scmp.eq.s32.totalorder %s28, 1
      %p93 = por %p91, %p92
      %p94 = scmp.ne.s32.totalorder %s85, %s86
      %p95 = scmp.eq.s32.totalorder %s28, 0
      %p96 = por %p94, %p95
      %p97 = scmp.ne.s32.totalorder %s85, %s86
      %p98 = scmp.eq.s32.totalorder %s29, 1
      %p99 = por %p97, %p98
      %p101 = scmp.ne.s32.totalorder %s86, %s100
      %p102 = scmp.eq.s32.totalorder %s29, 0
      %p103 = por %p101, %p102
      %s105 = sadd.s32 %s104, 1
      %p108 = scmp.eq.s32.totalorder %s23, 1
      %p109 = scmp.ne.s32.totalorder %s104, %s106
      %p110 = scmp.eq.s32.totalorder %s23, 0
      %p111 = por %p109, %p110
      %p112 = scmp.ne.s32.totalorder %s104, %s106
      %p113 = scmp.eq.s32.totalorder %s28, 1
      %p114 = por %p112, %p113
      %p115 = scmp.ne.s32.totalorder %s106, %s107
      %p116 = scmp.eq.s32.totalorder %s28, 0
      %p117 = por %p115, %p116
      %p118 = scmp.ne.s32.totalorder %s106, %s107
      %p119 = scmp.eq.s32.totalorder %s29, 1
      %p120 = por %p118, %p119
      %p122 = scmp.ne.s32.totalorder %s107, %s121
      %p123 = scmp.eq.s32.totalorder %s29, 0
      %p124 = por %p122, %p123
      %s126 = sadd.s32 %s125, 1
      %p129 = scmp.eq.s32.totalorder %s23, 1
      %p130 = scmp.ne.s32.totalorder %s125, %s127
      %p131 = scmp.eq.s32.totalorder %s23, 0
      %p132 = por %p130, %p131
      %p133 = scmp.ne.s32.totalorder %s125, %s127
      %p134 = scmp.eq.s32.totalorder %s28, 1
      %p135 = por %p133, %p134
      %p136 = scmp.ne.s32.totalorder %s127, %s128
      %p137 = scmp.eq.s32.totalorder %s28, 0
      %p138 = por %p136, %p137
      %p139 = scmp.ne.s32.totalorder %s127, %s128
      %p140 = scmp.eq.s32.totalorder %s29, 1
      %p141 = por %p139, %p140
      %p143 = scmp.ne.s32.totalorder %s128, %s142
      %p144 = scmp.eq.s32.totalorder %s29, 0
      %p145 = por %p143, %p144
      %s147 = sadd.s32 %s146, 1
      %p150 = scmp.eq.s32.totalorder %s23, 1
      %p151 = scmp.ne.s32.totalorder %s146, %s148
      %p152 = scmp.eq.s32.totalorder %s23, 0
      %p153 = por %p151, %p152
      %p154 = scmp.ne.s32.totalorder %s146, %s148
      %p155 = scmp.eq.s32.totalorder %s28, 1
      %p156 = por %p154, %p155
      %p157 = scmp.ne.s32.totalorder %s148, %s149
      %p158 = scmp.eq.s32.totalorder %s28, 0
      %p159 = por %p157, %p158
      %p160 = scmp.ne.s32.totalorder %s148, %s149
      %p161 = scmp.eq.s32.totalorder %s29, 1
      %p162 = por %p160, %p161
      %p164 = scmp.ne.s32.totalorder %s149, %s163
      %p165 = scmp.eq.s32.totalorder %s29, 0
      %p166 = por %p164, %p165
      %s168 = sadd.s32 %s167, 1
      %p171 = scmp.eq.s32.totalorder %s23, 1
      %p172 = scmp.ne.s32.totalorder %s167, %s169
      %p173 = scmp.eq.s32.totalorder %s23, 0
      %p174 = por %p172, %p173
      %p175 = scmp.ne.s32.totalorder %s167, %s169
      %p176 = scmp.eq.s32.totalorder %s28, 1
      %p177 = por %p175, %p176
      %p178 = scmp.ne.s32.totalorder %s169, %s170
      %p179 = scmp.eq.s32.totalorder %s28, 0
      %p180 = por %p178, %p179
      %p181 = scmp.ne.s32.totalorder %s169, %s170
      %p182 = scmp.eq.s32.totalorder %s29, 1
      %p183 = por %p181, %p182
      %p185 = scmp.ne.s32.totalorder %s170, %s184
      %p186 = scmp.eq.s32.totalorder %s29, 0
      %p187 = por %p185, %p186
      %s189 = sadd.s32 %s188, 1
      %p192 = scmp.eq.s32.totalorder %s23, 1
      %p193 = scmp.ne.s32.totalorder %s188, %s190
      %p194 = scmp.eq.s32.totalorder %s23, 0
      %p195 = por %p193, %p194
      %p196 = scmp.ne.s32.totalorder %s188, %s190
      %p197 = scmp.eq.s32.totalorder %s28, 1
      %p198 = por %p196, %p197
      %p199 = scmp.ne.s32.totalorder %s190, %s191
      %p200 = scmp.eq.s32.totalorder %s28, 0
      %p201 = por %p199, %p200
      %p202 = scmp.ne.s32.totalorder %s190, %s191
      %p203 = scmp.eq.s32.totalorder %s29, 1
      %p204 = por %p202, %p203
      %p206 = scmp.ne.s32.totalorder %s191, %s205
      %p207 = scmp.eq.s32.totalorder %s29, 0
      %p208 = por %p206, %p207
      %s210 = sadd.s32 %s209, 1
      %p213 = scmp.eq.s32.totalorder %s23, 1
      %p214 = scmp.ne.s32.totalorder %s209, %s211
      %p215 = scmp.eq.s32.totalorder %s23, 0
      %p216 = por %p214, %p215
      %p217 = scmp.ne.s32.totalorder %s209, %s211
      %p218 = scmp.eq.s32.totalorder %s28, 1
      %p219 = por %p217, %p218
      %p220 = scmp.ne.s32.totalorder %s211, %s212
      %p221 = scmp.eq.s32.totalorder %s28, 0
      %p222 = por %p220, %p221
      %p223 = scmp.ne.s32.totalorder %s211, %s212
      %p224 = scmp.eq.s32.totalorder %s29, 1
      %p225 = por %p223, %p224
      %p227 = scmp.ne.s32.totalorder %s212, %s226
      %p228 = scmp.eq.s32.totalorder %s29, 0
      %p229 = por %p227, %p228
      %s230 = ssub.s32 %s23, %s30
      %p231 = scmp.eq.s32.totalorder %s230, 0
      %s233 = sadd.s32 %s232, 1
      %s234 = scalar_select %p231, %s232, %s233
      %p237 = pneg %p231
      %p238 = scmp.eq.s32.totalorder %s23, 1
      %p239 = por %p237, %p238
      %p240 = scmp.ne.s32.totalorder %s232, %s235
      %p241 = scmp.eq.s32.totalorder %s23, 0
      %p242 = por %p240, %p241
      %p243 = scmp.ne.s32.totalorder %s232, %s235
      %p244 = scmp.eq.s32.totalorder %s28, 1
      %p245 = por %p243, %p244
      %p246 = scmp.ne.s32.totalorder %s235, %s236
      %p247 = scmp.eq.s32.totalorder %s28, 0
      %p248 = por %p246, %p247
      %p249 = scmp.ne.s32.totalorder %s235, %s236
      %p250 = scmp.eq.s32.totalorder %s29, 1
      %p251 = por %p249, %p250
      %p253 = scmp.ne.s32.totalorder %s236, %s252
      %p254 = scmp.eq.s32.totalorder %s29, 0
      %p255 = por %p253, %p254
      %p256 = scmp.le.s32.totalorder 1, %s23
      %p257 = scmp.lt.s32.totalorder %s23, 3
      %p258 = pnand %p256, %p257
      %p259 = pneg %p258
      // Predicated region
      $region9: #{tpu_custom_call.1} parent=5 // pred_check
        _
      $region10: #{tpu_custom_call.1} parent=5 // pred_check_branch
        %261 = sbr.rel (%p258) target = $region12
      $region11: #{tpu_custom_call.1} parent=5 // pred_region
        %s262 = ssub.s32 %s23, 1
        // Predicated region
        $region13: #{tpu_custom_call.1} parent=11 // pred_check
          %p263 = pneg %p96
        $region14: #{tpu_custom_call.1} parent=11 // pred_check_branch
          %265 = sbr.rel (%p263) target = $region16
        $region15: #{tpu_custom_call.1} parent=11 // pred_region
          %s267 = ssub.s32 16, 16
          %268 = vsyncadd [#allocation6], %s267
          %s270 = sshll.u32 [#allocation5], 4
          %s271 = int_to_ptr.vmem [resolvable:$true] %s270
          %273 = dma.hbm_to_vmem [thread:$0]  %s2, 16, %s271, [#allocation6]
        $region16: #{tpu_custom_call.1} parent=11 // pred_fallthru
          _
        // Predicated region
        $region17: #{tpu_custom_call.1} parent=11 // pred_check
          %p274 = pneg %p117
        $region18: #{tpu_custom_call.1} parent=11 // pred_check_branch
          %276 = sbr.rel (%p274) target = $region20
        $region19: #{tpu_custom_call.1} parent=11 // pred_region
          %s278 = ssub.s32 16, 16
          %279 = vsyncadd [#allocation6], %s278
          %s281 = sshll.u32 [#allocation7], 4
          %s282 = int_to_ptr.vmem [resolvable:$true] %s281
          %284 = dma.hbm_to_vmem [thread:$0]  %s3, 16, %s282, [#allocation6]
        $region20: #{tpu_custom_call.1} parent=11 // pred_fallthru
          _
        // Predicated region
        $region21: #{tpu_custom_call.1} parent=11 // pred_check
          %p285 = pneg %p138
        $region22: #{tpu_custom_call.1} parent=11 // pred_check_branch
          %287 = sbr.rel (%p285) target = $region24
        $region23: #{tpu_custom_call.1} parent=11 // pred_region
          _
        $region24: #{tpu_custom_call.1} parent=11 // pred_fallthru
          _
        // Predicated region
        $region25: #{tpu_custom_call.1} parent=11 // pred_check
          %p288 = pneg %p159
        $region26: #{tpu_custom_call.1} parent=11 // pred_check_branch
          %290 = sbr.rel (%p288) target = $region28
        $region27: #{tpu_custom_call.1} parent=11 // pred_region
          %s292 = ssub.s32 16, 16
          %293 = vsyncadd [#allocation9], %s292
          %s295 = sshll.u32 [#allocation8], 4
          %s296 = int_to_ptr.vmem [resolvable:$true] %s295
          %298 = dma.hbm_to_vmem [thread:$0]  %s5, 16, %s296, [#allocation9]
        $region28: #{tpu_custom_call.1} parent=11 // pred_fallthru
          _
        // Predicated region
        $region29: #{tpu_custom_call.1} parent=11 // pred_check
          %p299 = pneg %p180
        $region30: #{tpu_custom_call.1} parent=11 // pred_check_branch
          %301 = sbr.rel (%p299) target = $region32
        $region31: #{tpu_custom_call.1} parent=11 // pred_region
          _
        $region32: #{tpu_custom_call.1} parent=11 // pred_fallthru
          _
        // Predicated region
        $region33: #{tpu_custom_call.1} parent=11 // pred_check
          %p302 = pneg %p201
        $region34: #{tpu_custom_call.1} parent=11 // pred_check_branch
          %304 = sbr.rel (%p302) target = $region36
        $region35: #{tpu_custom_call.1} parent=11 // pred_region
          _
        $region36: #{tpu_custom_call.1} parent=11 // pred_fallthru
          _
        // Predicated region
        $region37: #{tpu_custom_call.1} parent=11 // pred_check
          %p305 = pneg %p222
        $region38: #{tpu_custom_call.1} parent=11 // pred_check_branch
          %307 = sbr.rel (%p305) target = $region40
        $region39: #{tpu_custom_call.1} parent=11 // pred_region
          _
        $region40: #{tpu_custom_call.1} parent=11 // pred_fallthru
          _
      $region12: #{tpu_custom_call.1} parent=5 // pred_fallthru
        _
      %p308 = scmp.lt.s32.totalorder %s23, 2
      // Predicated region
      $region41: #{tpu_custom_call.1} parent=5 // pred_check
        %p309 = pneg %p308
      $region42: #{tpu_custom_call.1} parent=5 // pred_check_branch
        %311 = sbr.rel (%p309) target = $region44
      $region43: #{tpu_custom_call.1} parent=5 // pred_region
        // Predicated region
        $region45: #{tpu_custom_call.1} parent=43 // pred_check
          %p312 = pneg %p43
        $region46: #{tpu_custom_call.1} parent=43 // pred_check_branch
          %314 = sbr.rel (%p312) target = $region48
        $region47: #{tpu_custom_call.1} parent=43 // pred_region
          %s315 = sand.u32 %s33, 1
          %s316 = scalar_lea.sflag [#allocation3], %s315
          %s317 = sand.u32 %s33, 1
          %s318 = smul.addr %s317, 8
          %s319 = scalar_lea.vmem [#allocation2], %s318
          %s321 = ssub.s32 128, 128
          %322 = vsyncadd %s316, %s321
          %s323 = smul.addr %s23, 128
          %s324 = scalar_lea.hbm %s0, %s323
          %s326 = sshll.u32 %s319, 4
          %s327 = int_to_ptr.vmem [resolvable:$true] %s326
          %329 = dma.hbm_to_vmem [thread:$0]  %s324, 128, %s327, %s316
        $region48: #{tpu_custom_call.1} parent=43 // pred_fallthru
          _
        // Predicated region
        $region49: #{tpu_custom_call.1} parent=43 // pred_check
          %p330 = pneg %p69
        $region50: #{tpu_custom_call.1} parent=43 // pred_check_branch
          %332 = sbr.rel (%p330) target = $region52
        $region51: #{tpu_custom_call.1} parent=43 // pred_region
          %p333 = scmp.lt.s32.totalorder %s23, 1
          %s334 = scalar_select %p333, %s23, 1
          %s335 = smul.addr %s334, 8
          %s336 = scalar_lea.vmem %s1, %s335
        $region52: #{tpu_custom_call.1} parent=43 // pred_fallthru
          _
      $region44: #{tpu_custom_call.1} parent=5 // pred_fallthru
        _
      %p337 = scmp.le.s32.totalorder 1, %s23
      %p338 = scmp.lt.s32.totalorder %s23, 3
      %p339 = pnand %p337, %p338
      %p340 = pneg %p339
      // Predicated region
      $region53: #{tpu_custom_call.1} parent=5 // pred_check
        _
      $region54: #{tpu_custom_call.1} parent=5 // pred_check_branch
        %342 = sbr.rel (%p339) target = $region56
      $region55: #{tpu_custom_call.1} parent=5 // pred_region
        %s343 = ssub.s32 %s23, 1
        %s344 = sand.u32 %s36, 1
        %s345 = scalar_lea.sflag [#allocation3], %s344
        %s346 = sand.u32 %s36, 1
        %s347 = smul.addr %s346, 8
        %s348 = scalar_lea.vmem [#allocation2], %s347
        // Predicated region
        $region57: #{tpu_custom_call.1} parent=55 // pred_check
          %p349 = pneg %p49
        $region58: #{tpu_custom_call.1} parent=55 // pred_check_branch
          %351 = sbr.rel (%p349) target = $region60
        $region59: #{tpu_custom_call.1} parent=55 // pred_region
          %352 = dma.done %s345, 128
        $region60: #{tpu_custom_call.1} parent=55 // pred_fallthru
          _
        // Predicated region
        $region61: #{tpu_custom_call.1} parent=55 // pred_check
          %p353 = pneg %p96
        $region62: #{tpu_custom_call.1} parent=55 // pred_check_branch
          %355 = sbr.rel (%p353) target = $region64
        $region63: #{tpu_custom_call.1} parent=55 // pred_region
          %356 = dma.done [#allocation6], 16
        $region64: #{tpu_custom_call.1} parent=55 // pred_fallthru
          _
        // Predicated region
        $region65: #{tpu_custom_call.1} parent=55 // pred_check
          %p357 = pneg %p117
        $region66: #{tpu_custom_call.1} parent=55 // pred_check_branch
          %359 = sbr.rel (%p357) target = $region68
        $region67: #{tpu_custom_call.1} parent=55 // pred_region
          %360 = dma.done [#allocation6], 16
        $region68: #{tpu_custom_call.1} parent=55 // pred_fallthru
          _
        // Predicated region
        $region69: #{tpu_custom_call.1} parent=55 // pred_check
          %p361 = pneg %p159
        $region70: #{tpu_custom_call.1} parent=55 // pred_check_branch
          %363 = sbr.rel (%p361) target = $region72
        $region71: #{tpu_custom_call.1} parent=55 // pred_region
          %364 = dma.done [#allocation9], 16
        $region72: #{tpu_custom_call.1} parent=55 // pred_fallthru
          _
        %s365 = sand.u32 %s36, 1
        %s366 = scalar_lea.sflag [#allocation3], %s365
        %s367 = sand.u32 %s36, 1
        %s368 = smul.addr %s367, 8
        %s369 = scalar_lea.vmem [#allocation2], %s368
        %p370 = pneg %p49
        %p371 = pneg %p46
        %p372 = scmp.lt.s32.totalorder %s28, 1
        %s373 = scalar_select %p372, %s28, 1
        %s374 = smul.addr %s373, 8
        %s375 = scalar_lea.vmem %s1, %s374
        %p376 = pneg %p75
        %p377 = pneg %p72
        %p378 = pneg %p96
        %p379 = pneg %p93
        %p380 = pneg %p117
        %p381 = pneg %p114
        %p382 = pneg %p138
        %p383 = pneg %p135
        %p384 = pneg %p159
        %p385 = pneg %p156
        %p386 = pneg %p180
        %p387 = pneg %p177
        %p388 = pneg %p201
        %p389 = pneg %p198
        %p390 = pneg %p222
        %p391 = pneg %p219
        %p392 = pneg %p248
        %p393 = pneg %p245
        %s394 = sand.u32 %s235, 1
        %s395 = scalar_lea.sflag [#allocation4], %s394
        %s396 = sand.u32 %s235, 1
        %s397 = smul.addr %s396, 8
        %s398 = scalar_lea.vmem [#allocation10], %s397
        %p399 = scmp.lt.s32.totalorder %s28, 1
        %s400 = scalar_select %p399, %s28, 1
        %s401 = smul.addr %s400, 8
        %s402 = scalar_lea.vmem %s1, %s401
        %v403 = vld [vmem:[%s348] sm:$0xff]
        %v404 = vld [vmem:[%s402] sm:$0xff]
        %vm405 = vcmask 261120
        %v406 = vsel %vm405, %v403, 0.0
        %407 = vadd.xlane.f32.xlu0 %v406
        %v408 = vpop.xlane.xlu0 %407
        %v409 = vrcp.pop 32.0
        %v410 = vmul.f32 %v408, %v409
        %v411 = vsub.f32 %v403, %v410
        %v412 = vmul.f32 %v411, %v411
        %v413 = vsel %vm405, %v412, 0.0
        %414 = vadd.xlane.f32.xlu0 %v413
        %v415 = vpop.xlane.xlu0 %414
        %v416 = vmul.f32 %v415, %v409
        %v417 = vadd.f32 %v416, 1e-05
        %v418 = vrsqrt.pop %v417
        %v419 = vmul.f32 %v411, %v418
        %v420 = vld [vmem:[#allocation5] sm:$0x1]
        %v422 = vlaneseq
        %v423 = vshrl.u32 %v422, 7
        %v424 = vsub.s32 0, %v423
        %v425 = vrot.slane %v420, %v424
        %v427 = vmul.f32 %v419, %v425
        %v428 = vld [vmem:[#allocation7] sm:$0x1]
        %v430 = vlaneseq
        %v431 = vshrl.u32 %v430, 7
        %v432 = vsub.s32 0, %v431
        %v433 = vrot.slane %v428, %v432
        %v435 = vadd.f32 %v427, %v433
        %v436 = vld [vmem:[%s4] sm:$0xff]
        %v437 = vld [vmem:[%s4 + $0x8] sm:$0xff]
        %v438 = vld [vmem:[%s4 + $0x10] sm:$0xff]
        %v439 = vld [vmem:[%s4 + $0x18] sm:$0xff]
        %v440 = vld [vmem:[#allocation8] sm:$0x1]
        %v442 = vlaneseq
        %v443 = vshrl.u32 %v442, 7
        %v444 = vsub.s32 0, %v443
        %v445 = vrot.slane %v440, %v444
        %v448 = vsel %vm405, %v435, 0
        %450 = vmatprep.subr.mxu0 0.0
        %451 = vmatpush1.msra.mxu0 %v436
        %452 = vmatprep.subr.mxu0 0.0
        %453 = vmatpush1.msra.mxu0 %v437
        %454 = vmatprep.subr.mxu0 0.0
        %455 = vmatpush1.msra.mxu0 %v438
        %456 = vmatprep.subr.mxu0 0.0
        %457 = vmatpush1.msra.mxu0 %v439
        %458 = vmatprep.subr.mxu0 0.0
        %459 = vmatpush1.msra.mxu0 0.0
        %460 = vmatprep.subr.mxu0 0.0
        %461 = vmatpush1.msra.mxu0 0.0
        %462 = vmatprep.subr.mxu0 0.0
        %463 = vmatpush1.msra.mxu0 0.0
        %464 = vmatprep.subr.mxu0 0.0
        %465 = vmatpush1.msra.mxu0 0.0
        %466 = vmatprep.subr.mxu0 0.0
        %467 = vmatpush1.msra.mxu0 0.0
        %468 = vmatprep.subr.mxu0 0.0
        %469 = vmatpush1.msra.mxu0 0.0
        %470 = vmatprep.subr.mxu0 0.0
        %471 = vmatpush1.msra.mxu0 0.0
        %472 = vmatprep.subr.mxu0 0.0
        %473 = vmatpush1.msra.mxu0 0.0
        %474 = vmatprep.subr.mxu0 0.0
        %475 = vmatpush1.msra.mxu0 0.0
        %476 = vmatprep.subr.mxu0 0.0
        %477 = vmatpush1.msra.mxu0 0.0
        %478 = vmatprep.subr.mxu0 0.0
        %479 = vmatpush1.msra.mxu0 0.0
        %480 = vmatprep.subr.mxu0 0.0
        %481 = vmatpush1.msra.mxu0 0.0
        %482 = vmatprep.subr.mxu0 0.0
        %483 = vmatpush1.msra.mxu0 0.0
        %484 = vmatprep.subr.mxu0 0.0
        %485 = vmatpush1.msra.mxu0 0.0
        %486 = vmatprep.subr.mxu0 0.0
        %487 = vmatpush1.msra.mxu0 0.0
        %488 = vmatprep.subr.mxu0 0.0
        %489 = vmatpush1.msra.mxu0 0.0
        %490 = vmatprep.subr.mxu0 0.0
        %491 = vmatpush1.msra.mxu0 0.0
        %492 = vmatprep.subr.mxu0 0.0
        %493 = vmatpush1.msra.mxu0 0.0
        %494 = vmatprep.subr.mxu0 0.0
        %495 = vmatpush1.msra.mxu0 0.0
        %496 = vmatprep.subr.mxu0 0.0
        %497 = vmatpush1.msra.mxu0 0.0
        %498 = vmatprep.subr.mxu0 0.0
        %499 = vmatpush1.msra.mxu0 0.0
        %500 = vmatprep.subr.mxu0 0.0
        %501 = vmatpush1.msra.mxu0 0.0
        %502 = vmatprep.subr.mxu0 0.0
        %503 = vmatpush1.msra.mxu0 0.0
        %504 = vmatprep.subr.mxu0 0.0
        %505 = vmatpush1.msra.mxu0 0.0
        %506 = vmatprep.subr.mxu0 0.0
        %507 = vmatpush1.msra.mxu0 0.0
        %508 = vmatprep.subr.mxu0 0.0
        %509 = vmatpush1.msra.mxu0 0.0
        %510 = vmatprep.subr.mxu0 0.0
        %511 = vmatpush1.msra.mxu0 0.0
        %512 = vmatprep.subr.mxu0 0.0
        %513 = vmatpush1.msra.mxu0 0.0
        %514 = vmatprep.mubr.f32.mxu0 0.0
        %515 = vmatmul.mubr.f32.gmra.mrb[0].mxu0 %v448
        %v516 = vpop.f32.mrb[0].mxu0
        %v517 = vadd.f32 %v445, %v516
        %v518 = vpop.f32.mrb[0].mxu0
        %519 = vdwg.mxu0
        %v520 = vsub.f32 1.0, %v404
        %v521 = vmul.f32 %v520, -1000000.0
        %523 = vset.pattern.permute.xlu0 0
        %524 = vperm.xlu0 %523, %v521
        %v525 = vpop.permute.xlu0 %524
        %v527 = vadd.f32 %v517, %v525
        %529 = vset.pattern.permute.xlu0 0
        %530 = vperm.xlu0 %529, %v404
        %v531 = vpop.permute.xlu0 %530
        %v533 = vmul.f32 %v517, %v531
        %v534 = vsel %vm405, %v517, -inf
        %535 = vmax.xlane.f32.xlu0 %v534
        %v536 = vpop.xlane.xlu0 %535
        %v537 = vsub.f32 %v517, %v536
        %v538 = vmul.f32 %v537, 1.442695
        %v539 = vpow.pop %v538
        %v540 = vld [vmem:[%s7] sm:$0xff]
        %v541 = vld [vmem:[%s7 + $0x8] sm:$0xff]
        %v542 = vld [vmem:[%s7 + $0x10] sm:$0xff]
        %v543 = vld [vmem:[%s7 + $0x18] sm:$0xff]
        %v545 = vsel %vm405, %v539, 0
        %547 = vmatprep.subr.mxu0 0.0
        %548 = vmatpush1.msra.mxu0 %v540
        %549 = vmatprep.subr.mxu0 0.0
        %550 = vmatpush1.msra.mxu0 %v541
        %551 = vmatprep.subr.mxu0 0.0
        %552 = vmatpush1.msra.mxu0 %v542
        %553 = vmatprep.subr.mxu0 0.0
        %554 = vmatpush1.msra.mxu0 %v543
        %555 = vmatprep.subr.mxu0 0.0
        %556 = vmatpush1.msra.mxu0 0.0
        %557 = vmatprep.subr.mxu0 0.0
        %558 = vmatpush1.msra.mxu0 0.0
        %559 = vmatprep.subr.mxu0 0.0
        %560 = vmatpush1.msra.mxu0 0.0
        %561 = vmatprep.subr.mxu0 0.0
        %562 = vmatpush1.msra.mxu0 0.0
        %563 = vmatprep.subr.mxu0 0.0
        %564 = vmatpush1.msra.mxu0 0.0
        %565 = vmatprep.subr.mxu0 0.0
        %566 = vmatpush1.msra.mxu0 0.0
        %567 = vmatprep.subr.mxu0 0.0
        %568 = vmatpush1.msra.mxu0 0.0
        %569 = vmatprep.subr.mxu0 0.0
        %570 = vmatpush1.msra.mxu0 0.0
        %571 = vmatprep.subr.mxu0 0.0
        %572 = vmatpush1.msra.mxu0 0.0
        %573 = vmatprep.subr.mxu0 0.0
        %574 = vmatpush1.msra.mxu0 0.0
        %575 = vmatprep.subr.mxu0 0.0
        %576 = vmatpush1.msra.mxu0 0.0
        %577 = vmatprep.subr.mxu0 0.0
        %578 = vmatpush1.msra.mxu0 0.0
        %579 = vmatprep.subr.mxu0 0.0
        %580 = vmatpush1.msra.mxu0 0.0
        %581 = vmatprep.subr.mxu0 0.0
        %582 = vmatpush1.msra.mxu0 0.0
        %583 = vmatprep.subr.mxu0 0.0
        %584 = vmatpush1.msra.mxu0 0.0
        %585 = vmatprep.subr.mxu0 0.0
        %586 = vmatpush1.msra.mxu0 0.0
        %587 = vmatprep.subr.mxu0 0.0
        %588 = vmatpush1.msra.mxu0 0.0
        %589 = vmatprep.subr.mxu0 0.0
        %590 = vmatpush1.msra.mxu0 0.0
        %591 = vmatprep.subr.mxu0 0.0
        %592 = vmatpush1.msra.mxu0 0.0
        %593 = vmatprep.subr.mxu0 0.0
        %594 = vmatpush1.msra.mxu0 0.0
        %595 = vmatprep.subr.mxu0 0.0
        %596 = vmatpush1.msra.mxu0 0.0
        %597 = vmatprep.subr.mxu0 0.0
        %598 = vmatpush1.msra.mxu0 0.0
        %599 = vmatprep.subr.mxu0 0.0
        %600 = vmatpush1.msra.mxu0 0.0
        %601 = vmatprep.subr.mxu0 0.0
        %602 = vmatpush1.msra.mxu0 0.0
        %603 = vmatprep.subr.mxu0 0.0
        %604 = vmatpush1.msra.mxu0 0.0
        %605 = vmatprep.subr.mxu0 0.0
        %606 = vmatpush1.msra.mxu0 0.0
        %607 = vmatprep.subr.mxu0 0.0
        %608 = vmatpush1.msra.mxu0 0.0
        %609 = vmatprep.subr.mxu0 0.0
        %610 = vmatpush1.msra.mxu0 0.0
        %611 = vmatprep.mubr.f32.mxu0 0.0
        %612 = vmatmul.mubr.f32.gmra.mrb[0].mxu0 %v545
        %v613 = vpop.f32.mrb[0].mxu0
        %v614 = vadd.f32 0.0, %v613
        %v615 = vpop.f32.mrb[0].mxu0
        %616 = vdwg.mxu0
        %v617 = vld [vmem:[%s8] sm:$0xf]
        %vm618 = vcmask 31744
        %v620 = vsel %vm618, %v614, 0
        %vm622 = vcmask 1043456
        %v624 = vsel %vm622, %v617, 0
        %626 = vmatprep.subr.mxu0 0.0
        %627 = vmatpush1.msra.mxu0 %v624
        %628 = vmatprep.subr.mxu0 0.0
        %629 = vmatpush1.msra.mxu0 0.0
        %630 = vmatprep.subr.mxu0 0.0
        %631 = vmatpush1.msra.mxu0 0.0
        %632 = vmatprep.subr.mxu0 0.0
        %633 = vmatpush1.msra.mxu0 0.0
        %634 = vmatprep.subr.mxu0 0.0
        %635 = vmatpush1.msra.mxu0 0.0
        %636 = vmatprep.subr.mxu0 0.0
        %637 = vmatpush1.msra.mxu0 0.0
        %638 = vmatprep.subr.mxu0 0.0
        %639 = vmatpush1.msra.mxu0 0.0
        %640 = vmatprep.subr.mxu0 0.0
        %641 = vmatpush1.msra.mxu0 0.0
        %642 = vmatprep.subr.mxu0 0.0
        %643 = vmatpush1.msra.mxu0 0.0
        %644 = vmatprep.subr.mxu0 0.0
        %645 = vmatpush1.msra.mxu0 0.0
        %646 = vmatprep.subr.mxu0 0.0
        %647 = vmatpush1.msra.mxu0 0.0
        %648 = vmatprep.subr.mxu0 0.0
        %649 = vmatpush1.msra.mxu0 0.0
        %650 = vmatprep.subr.mxu0 0.0
        %651 = vmatpush1.msra.mxu0 0.0
        %652 = vmatprep.subr.mxu0 0.0
        %653 = vmatpush1.msra.mxu0 0.0
        %654 = vmatprep.subr.mxu0 0.0
        %655 = vmatpush1.msra.mxu0 0.0
        %656 = vmatprep.subr.mxu0 0.0
        %657 = vmatpush1.msra.mxu0 0.0
        %658 = vmatprep.subr.mxu0 0.0
        %659 = vmatpush1.msra.mxu0 0.0
        %660 = vmatprep.subr.mxu0 0.0
        %661 = vmatpush1.msra.mxu0 0.0
        %662 = vmatprep.subr.mxu0 0.0
        %663 = vmatpush1.msra.mxu0 0.0
        %664 = vmatprep.subr.mxu0 0.0
        %665 = vmatpush1.msra.mxu0 0.0
        %666 = vmatprep.subr.mxu0 0.0
        %667 = vmatpush1.msra.mxu0 0.0
        %668 = vmatprep.subr.mxu0 0.0
        %669 = vmatpush1.msra.mxu0 0.0
        %670 = vmatprep.subr.mxu0 0.0
        %671 = vmatpush1.msra.mxu0 0.0
        %672 = vmatprep.subr.mxu0 0.0
        %673 = vmatpush1.msra.mxu0 0.0
        %674 = vmatprep.subr.mxu0 0.0
        %675 = vmatpush1.msra.mxu0 0.0
        %676 = vmatprep.subr.mxu0 0.0
        %677 = vmatpush1.msra.mxu0 0.0
        %678 = vmatprep.subr.mxu0 0.0
        %679 = vmatpush1.msra.mxu0 0.0
        %680 = vmatprep.subr.mxu0 0.0
        %681 = vmatpush1.msra.mxu0 0.0
        %682 = vmatprep.subr.mxu0 0.0
        %683 = vmatpush1.msra.mxu0 0.0
        %684 = vmatprep.subr.mxu0 0.0
        %685 = vmatpush1.msra.mxu0 0.0
        %686 = vmatprep.subr.mxu0 0.0
        %687 = vmatpush1.msra.mxu0 0.0
        %688 = vmatprep.subr.mxu0 0.0
        %689 = vmatpush1.msra.mxu0 0.0
        %690 = vmatprep.mubr.f32.mxu0 0.0
        %691 = vmatmul.mubr.f32.gmra.mrb[0].mxu0 %v620
        %v692 = vpop.f32.mrb[0].mxu0
        %v693 = vadd.f32 0.0, %v692
        %v694 = vpop.f32.mrb[0].mxu0
        %695 = vdwg.mxu0
        %v696 = vmax.f32 %v693, 1e-30
        %v697 = vrcp.pop %v696
        %v698 = vmul.f32 %v539, %v697
        %v699 = vld [vmem:[%s6] sm:$0xff]
        %v700 = vld [vmem:[%s6 + $0x8] sm:$0xff]
        %v701 = vld [vmem:[%s6 + $0x10] sm:$0xff]
        %v702 = vld [vmem:[%s6 + $0x18] sm:$0xff]
        %vm703 = vcmask 523520
        %v704 = vsel %vm703, %v527, -inf
        %v705 = vrot.slane %v704, 4
        %v706 = vmax.f32 %v704, %v705
        %v707 = vrot.slane %v706, 2
        %v708 = vmax.f32 %v706, %v707
        %v709 = vrot.slane %v708, 1
        %v710 = vmax.f32 %v708, %v709
        %v711 = vsub.f32 %v527, %v710
        %v712 = vmul.f32 %v711, 1.442695
        %v713 = vpow.pop %v712
        %v714 = vsel %vm703, %v713, 0.0
        %v715 = vrot.slane %v714, 4
        %v716 = vadd.f32 %v714, %v715
        %v717 = vrot.slane %v716, 2
        %v718 = vadd.f32 %v716, %v717
        %v719 = vrot.slane %v718, 1
        %v720 = vadd.f32 %v718, %v719
        %v721 = vrcp.pop %v720
        %v722 = vmul.f32 %v713, %v721
        %724 = vrot.lane.b32.xlu0 %v722, 96
        %v725 = vpop.permute.xlu0 %724
        %727 = vxpose.xlu0.b32.start [1/16] %v725, 128
        %728 = vxpose.xlu0.b32.cont [2/16] 0.0, 128
        %729 = vxpose.xlu0.b32.cont [3/16] 0.0, 128
        %730 = vxpose.xlu0.b32.cont [4/16] 0.0, 128
        %731 = vxpose.xlu0.b32.cont [5/16] 0.0, 128
        %732 = vxpose.xlu0.b32.cont [6/16] 0.0, 128
        %733 = vxpose.xlu0.b32.cont [7/16] 0.0, 128
        %734 = vxpose.xlu0.b32.cont [8/16] 0.0, 128
        %735 = vxpose.xlu0.b32.cont [9/16] 0.0, 128
        %736 = vxpose.xlu0.b32.cont [10/16] 0.0, 128
        %737 = vxpose.xlu0.b32.cont [11/16] 0.0, 128
        %738 = vxpose.xlu0.b32.cont [12/16] 0.0, 128
        %739 = vxpose.xlu0.b32.cont [13/16] 0.0, 128
        %740 = vxpose.xlu0.b32.cont [14/16] 0.0, 128
        %741 = vxpose.xlu0.b32.cont [15/16] 0.0, 128
        %742 = vxpose.xlu0.b32.end [16/16] 0.0, 128
        %v743 = vpop.trf.xlu0
        %v744 = vpop.trf.xlu0
        %v745 = vpop.trf.xlu0
        %v746 = vpop.trf.xlu0
        %v747 = vpop.trf.xlu0
        %v748 = vpop.trf.xlu0
        %v749 = vpop.trf.xlu0
        %v750 = vpop.trf.xlu0
        %v751 = vpop.trf.xlu0
        %v752 = vpop.trf.xlu0
        %v753 = vpop.trf.xlu0
        %v754 = vpop.trf.xlu0
        %v755 = vpop.trf.xlu0
        %v756 = vpop.trf.xlu0
        %v757 = vpop.trf.xlu0
        %v758 = vpop.trf.xlu0
        %760 = vrot.lane.b32.xlu0 %v533, 64
        %v761 = vpop.permute.xlu0 %760
        %vm763 = vcmask 64512
        %v765 = vsel %vm763, %v743, 0
        %v768 = vsel %vm763, %v744, 0
        %v771 = vsel %vm763, %v745, 0
        %v774 = vsel %vm763, %v746, 0
        %776 = vmatprep.subr.mxu0 0.0
        %777 = vmatpush1.msra.mxu0 %v761
        %778 = vmatprep.subr.mxu0 0.0
        %779 = vmatpush1.msra.mxu0 0.0
        %780 = vmatprep.subr.mxu0 0.0
        %781 = vmatpush1.msra.mxu0 0.0
        %782 = vmatprep.subr.mxu0 0.0
        %783 = vmatpush1.msra.mxu0 0.0
        %784 = vmatprep.subr.mxu0 0.0
        %785 = vmatpush1.msra.mxu0 0.0
        %786 = vmatprep.subr.mxu0 0.0
        %787 = vmatpush1.msra.mxu0 0.0
        %788 = vmatprep.subr.mxu0 0.0
        %789 = vmatpush1.msra.mxu0 0.0
        %790 = vmatprep.subr.mxu0 0.0
        %791 = vmatpush1.msra.mxu0 0.0
        %792 = vmatprep.subr.mxu0 0.0
        %793 = vmatpush1.msra.mxu0 0.0
        %794 = vmatprep.subr.mxu0 0.0
        %795 = vmatpush1.msra.mxu0 0.0
        %796 = vmatprep.subr.mxu0 0.0
        %797 = vmatpush1.msra.mxu0 0.0
        %798 = vmatprep.subr.mxu0 0.0
        %799 = vmatpush1.msra.mxu0 0.0
        %800 = vmatprep.subr.mxu0 0.0
        %801 = vmatpush1.msra.mxu0 0.0
        %802 = vmatprep.subr.mxu0 0.0
        %803 = vmatpush1.msra.mxu0 0.0
        %804 = vmatprep.subr.mxu0 0.0
        %805 = vmatpush1.msra.mxu0 0.0
        %806 = vmatprep.subr.mxu0 0.0
        %807 = vmatpush1.msra.mxu0 0.0
        %808 = vmatprep.subr.mxu0 0.0
        %809 = vmatpush1.msra.mxu0 0.0
        %810 = vmatprep.subr.mxu0 0.0
        %811 = vmatpush1.msra.mxu0 0.0
        %812 = vmatprep.subr.mxu0 0.0
        %813 = vmatpush1.msra.mxu0 0.0
        %814 = vmatprep.subr.mxu0 0.0
        %815 = vmatpush1.msra.mxu0 0.0
        %816 = vmatprep.subr.mxu0 0.0
        %817 = vmatpush1.msra.mxu0 0.0
        %818 = vmatprep.subr.mxu0 0.0
        %819 = vmatpush1.msra.mxu0 0.0
        %820 = vmatprep.subr.mxu0 0.0
        %821 = vmatpush1.msra.mxu0 0.0
        %822 = vmatprep.subr.mxu0 0.0
        %823 = vmatpush1.msra.mxu0 0.0
        %824 = vmatprep.subr.mxu0 0.0
        %825 = vmatpush1.msra.mxu0 0.0
        %826 = vmatprep.subr.mxu0 0.0
        %827 = vmatpush1.msra.mxu0 0.0
        %828 = vmatprep.subr.mxu0 0.0
        %829 = vmatpush1.msra.mxu0 0.0
        %830 = vmatprep.subr.mxu0 0.0
        %831 = vmatpush1.msra.mxu0 0.0
        %832 = vmatprep.subr.mxu0 0.0
        %833 = vmatpush1.msra.mxu0 0.0
        %834 = vmatprep.subr.mxu0 0.0
        %835 = vmatpush1.msra.mxu0 0.0
        %836 = vmatprep.subr.mxu0 0.0
        %837 = vmatpush1.msra.mxu0 0.0
        %838 = vmatprep.subr.mxu0 0.0
        %839 = vmatpush1.msra.mxu0 0.0
        %840 = vmatprep.mubr.f32.mxu0 0.0
        %841 = vmatmul.mubr.f32.gmra.mrb[0].mxu0 %v765
        %v842 = vpop.f32.mrb[0].mxu0
        %v843 = vadd.f32 0.0, %v842
        %v844 = vpop.f32.mrb[0].mxu0
        %845 = vmatprep.mubr.f32.mxu0 0.0
        %846 = vmatmul.mubr.f32.gmra.mrb[0].mxu0 %v768
        %v847 = vpop.f32.mrb[0].mxu0
        %v848 = vadd.f32 0.0, %v847
        %v849 = vpop.f32.mrb[0].mxu0
        %850 = vmatprep.mubr.f32.mxu0 0.0
        %851 = vmatmul.mubr.f32.gmra.mrb[0].mxu0 %v771
        %v852 = vpop.f32.mrb[0].mxu0
        %v853 = vadd.f32 0.0, %v852
        %v854 = vpop.f32.mrb[0].mxu0
        %855 = vmatprep.mubr.f32.mxu0 0.0
        %856 = vmatmul.mubr.f32.gmra.mrb[0].mxu0 %v774
        %v857 = vpop.f32.mrb[0].mxu0
        %v858 = vadd.f32 0.0, %v857
        %v859 = vpop.f32.mrb[0].mxu0
        %860 = vdwg.mxu0
        %v861 = vmul.f32 %v843, %v699
        %v862 = vmul.f32 %v848, %v700
        %v863 = vmul.f32 %v853, %v701
        %v864 = vmul.f32 %v858, %v702
        %v866 = vsel %vm405, %v698, 0
        %868 = vmatprep.subr.mxu0 0.0
        %869 = vmatpush1.msra.mxu0 %v861
        %870 = vmatprep.subr.mxu0 0.0
        %871 = vmatpush1.msra.mxu0 %v862
        %872 = vmatprep.subr.mxu0 0.0
        %873 = vmatpush1.msra.mxu0 %v863
        %874 = vmatprep.subr.mxu0 0.0
        %875 = vmatpush1.msra.mxu0 %v864
        %876 = vmatprep.subr.mxu0 0.0
        %877 = vmatpush1.msra.mxu0 0.0
        %878 = vmatprep.subr.mxu0 0.0
        %879 = vmatpush1.msra.mxu0 0.0
        %880 = vmatprep.subr.mxu0 0.0
        %881 = vmatpush1.msra.mxu0 0.0
        %882 = vmatprep.subr.mxu0 0.0
        %883 = vmatpush1.msra.mxu0 0.0
        %884 = vmatprep.subr.mxu0 0.0
        %885 = vmatpush1.msra.mxu0 0.0
        %886 = vmatprep.subr.mxu0 0.0
        %887 = vmatpush1.msra.mxu0 0.0
        %888 = vmatprep.subr.mxu0 0.0
        %889 = vmatpush1.msra.mxu0 0.0
        %890 = vmatprep.subr.mxu0 0.0
        %891 = vmatpush1.msra.mxu0 0.0
        %892 = vmatprep.subr.mxu0 0.0
        %893 = vmatpush1.msra.mxu0 0.0
        %894 = vmatprep.subr.mxu0 0.0
        %895 = vmatpush1.msra.mxu0 0.0
        %896 = vmatprep.subr.mxu0 0.0
        %897 = vmatpush1.msra.mxu0 0.0
        %898 = vmatprep.subr.mxu0 0.0
        %899 = vmatpush1.msra.mxu0 0.0
        %900 = vmatprep.subr.mxu0 0.0
        %901 = vmatpush1.msra.mxu0 0.0
        %902 = vmatprep.subr.mxu0 0.0
        %903 = vmatpush1.msra.mxu0 0.0
        %904 = vmatprep.subr.mxu0 0.0
        %905 = vmatpush1.msra.mxu0 0.0
        %906 = vmatprep.subr.mxu0 0.0
        %907 = vmatpush1.msra.mxu0 0.0
        %908 = vmatprep.subr.mxu0 0.0
        %909 = vmatpush1.msra.mxu0 0.0
        %910 = vmatprep.subr.mxu0 0.0
        %911 = vmatpush1.msra.mxu0 0.0
        %912 = vmatprep.subr.mxu0 0.0
        %913 = vmatpush1.msra.mxu0 0.0
        %914 = vmatprep.subr.mxu0 0.0
        %915 = vmatpush1.msra.mxu0 0.0
        %916 = vmatprep.subr.mxu0 0.0
        %917 = vmatpush1.msra.mxu0 0.0
        %918 = vmatprep.subr.mxu0 0.0
        %919 = vmatpush1.msra.mxu0 0.0
        %920 = vmatprep.subr.mxu0 0.0
        %921 = vmatpush1.msra.mxu0 0.0
        %922 = vmatprep.subr.mxu0 0.0
        %923 = vmatpush1.msra.mxu0 0.0
        %924 = vmatprep.subr.mxu0 0.0
        %925 = vmatpush1.msra.mxu0 0.0
        %926 = vmatprep.subr.mxu0 0.0
        %927 = vmatpush1.msra.mxu0 0.0
        %928 = vmatprep.subr.mxu0 0.0
        %929 = vmatpush1.msra.mxu0 0.0
        %930 = vmatprep.subr.mxu0 0.0
        %931 = vmatpush1.msra.mxu0 0.0
        %932 = vmatprep.mubr.f32.mxu0 0.0
        %933 = vmatmul.mubr.f32.gmra.mrb[0].mxu0 %v866
        %v934 = vpop.f32.mrb[0].mxu0
        %v935 = vadd.f32 0.0, %v934
        %v936 = vpop.f32.mrb[0].mxu0
        %937 = vdwg.mxu0
        %v938 = vadd.f32 %v403, %v935
        %939 = vst.msk [vmem:[%s398] sm:$0xff] %vm405, %v938
        %s940 = sand.u32 %s235, 1
        %s941 = scalar_lea.sflag [#allocation4], %s940
        %s942 = sand.u32 %s235, 1
        %s943 = smul.addr %s942, 8
        %s944 = scalar_lea.vmem [#allocation10], %s943
        // Predicated region
        $region73: #{tpu_custom_call.1} parent=55 // pred_check
          %p945 = pneg %p245
        $region74: #{tpu_custom_call.1} parent=55 // pred_check_branch
          %947 = sbr.rel (%p945) target = $region76
        $region75: #{tpu_custom_call.1} parent=55 // pred_region
          %s949 = ssub.s32 128, 128
          %950 = vsyncadd %s941, %s949
          %s951 = smul.addr %s28, 128
          %s952 = scalar_lea.hbm %s9, %s951
          %s954 = sshll.u32 %s944, 4
          %s955 = int_to_ptr.vmem [resolvable:$true] %s954
          %957 = dma.vmem_to_hbm [thread:$0]  %s955, 128, %s952, %s941
        $region76: #{tpu_custom_call.1} parent=55 // pred_fallthru
          _
      $region56: #{tpu_custom_call.1} parent=5 // pred_fallthru
        _
      %p958 = scmp.le.s32.totalorder 2, %s23
      // Predicated region
      $region77: #{tpu_custom_call.1} parent=5 // pred_check
        %p959 = pneg %p958
      $region78: #{tpu_custom_call.1} parent=5 // pred_check_branch
        %961 = sbr.rel (%p959) target = $region80
      $region79: #{tpu_custom_call.1} parent=5 // pred_region
        %s962 = ssub.s32 %s23, 2
        // Predicated region
        $region81: #{tpu_custom_call.1} parent=79 // pred_check
          %p963 = pneg %p251
        $region82: #{tpu_custom_call.1} parent=79 // pred_check_branch
          %965 = sbr.rel (%p963) target = $region84
        $region83: #{tpu_custom_call.1} parent=79 // pred_region
          %s966 = sand.u32 %s236, 1
          %s967 = scalar_lea.sflag [#allocation4], %s966
          %s968 = sand.u32 %s236, 1
          %s969 = smul.addr %s968, 8
          %s970 = scalar_lea.vmem [#allocation10], %s969
          %971 = dma.done %s967, 128
        $region84: #{tpu_custom_call.1} parent=79 // pred_fallthru
          _
      $region80: #{tpu_custom_call.1} parent=5 // pred_fallthru
        _
    $region6: #{tpu_custom_call.1} parent=1 // loop_footer
      %s27 = sadd.s32 1, %s23
    $region7: #{tpu_custom_call.1} parent=1 // loop_footer_branch
      %22 = sbr.rel target = $region3
    $region8: #{tpu_custom_call.1} parent=1 // loop_exit
      _
    %972 = vsyncpa [#allocation3], 1
    %s973 = scalar_lea.sflag [#allocation3], 1
    %974 = vsyncpa %s973, 1
    %975 = vsyncpa [#allocation6], 1
    %976 = vsyncpa [#allocation9], 1
    %977 = vsyncpa [#allocation4], 1
    %s978 = scalar_lea.sflag [#allocation4], 1
    %979 = vsyncpa %s978, 1

</llo_original>
